<compile_context>
chip_gen: v7x
topology: tpu7x:2x2x1
jax: 0.10.0
libtpu: 0.0.40
codegen_flags: <defaults>
</compile_context>

<pallas_src>
import functools
import math

import jax
import jax.numpy as jnp
from jax.experimental import pallas as pl
from jax.experimental.pallas import tpu as pltpu


def _bar_nll_kernel(logits_ref, y_ref, lower_ref, upper_ref, logw_ref, out_ref,
                    *, num_bars, groups):
    """One grid step == groups * 128 rows.

    logits_ref : (groups*128, num_bars)  native dtype (f32 / bf16 / ...)
    y_ref      : (groups*128, 1)         float32 targets (sublane-oriented)
    lower_ref  : (1, num_bars)           float32 borders[:-1]
    upper_ref  : (1, num_bars)           float32 borders[1:]
    logw_ref   : (1, num_bars)           float32 log bucket widths
    out_ref    : (groups, 128)           float32 nll, lane-dense rows
    """
    B = num_bars
    lower_row = lower_ref[...]                           # (1, B)
    upper_row = upper_ref[...]                           # (1, B)
    logw_row = logw_ref[...]                             # (1, B)

    # Constants hoisted out of the group loop (computed once per grid step).
    ri = jax.lax.broadcasted_iota(jnp.int32, (128, 128), 0)
    ci = jax.lax.broadcasted_iota(jnp.int32, (128, 128), 1)
    diag = ri == ci                                      # identity mask
    lane_b = jax.lax.broadcasted_iota(jnp.int32, (1, B), 1)
    first_mask = lane_b == 0                             # (1, B)
    last_mask = lane_b == (B - 1)                        # (1, B)

    def body(g, carry):
        r0 = pl.multiple_of(g * 128, 128)
        x = logits_ref[pl.ds(r0, 128), :].astype(jnp.float32)        # (128, B)
        y_col = y_ref[pl.ds(r0, 128), :]                              # (128, 1)
        ignore = jnp.isnan(y_col)

        # Bucket one-hot: borders[i] < y <= borders[i+1].  The lane-0 / last-
        # lane fixups reproduce searchsorted's y==borders[0] / y==borders[-1]
        # handling and clamp out-of-range y (like the old clip of the index).
        gt_lower = y_col > lower_row                                  # (128, B)
        le_upper = y_col <= upper_row                                 # (128, B)
        onehot = jnp.logical_and(gt_lower, le_upper)
        onehot = jnp.logical_or(
            onehot, jnp.logical_and(first_mask,
                                    jnp.logical_not(gt_lower[:, 0:1])))
        onehot = jnp.logical_or(
            onehot, jnp.logical_and(last_mask,
                                    jnp.logical_not(le_upper[:, B - 1:B])))

        # nll = (m + log(sum exp(x-m))) - (x[target] - log_width[target])
        m = jnp.max(x, axis=-1, keepdims=True)
        s = jnp.sum(jnp.exp(x - m), axis=-1, keepdims=True)
        gathered = jnp.sum(jnp.where(onehot, x - logw_row, 0.0),
                           axis=-1, keepdims=True)
        nll = m + jnp.log(s) - gathered
        nll = jnp.where(ignore, 0.0, nll)                             # (128, 1)

        # (128,1) column -> (1,128) lane-dense row: identity-select + sublane
        # reduce (exact, known to lower), then a dense store at row g.
        nll_row = jnp.sum(jnp.where(diag, nll, 0.0), axis=0, keepdims=True)
        out_ref[pl.ds(g, 1), :] = nll_row.astype(out_ref.dtype)
        return carry

    jax.lax.fori_loop(0, groups, body, 0, unroll=True)


def _pick_tile_rows(n128, num_bars, in_bytes, max_tile_rows, vmem_budget):
    """Largest 128-multiple row tile that (a) fits the generation-aware VMEM
    budget, (b) evenly divides the padded row count and (c) leaves >= 2 grid
    steps when possible (v7x has two TensorCores; >= 2 steps also enables
    BlockSpec double-buffering overlap)."""
    b_pad = ((num_bars + 127) // 128) * 128
    # f32 temporaries live inside ONE fori_loop group iteration
    # (x, x-m, exp, compare/one-hot masks, selected values).
    group_tmp = 6 * 128 * b_pad * 4
    fixed = group_tmp + 8 * b_pad * 4 + (1 << 19)        # border rows + slack
    # Double-buffered logits rows + lane-padded (tr,1) y block + out rows.
    per_row = 2 * b_pad * in_bytes + 2 * 128 * 4 + 16
    avail = max(vmem_budget - fixed, 0)
    cap = (avail // per_row) // 128 * 128
    cap = min(max(128, max_tile_rows // 128 * 128), n128, max(128, cap))
    if n128 >= 256:                                      # keep >= 2 grid steps
        cap = min(cap, (n128 // 2) // 128 * 128)
    tr = max(128, cap)
    while n128 % tr != 0:
        tr -= 128
    return tr


def bar_distribution_forward(logits, y, borders, *, max_tile_rows=2048):
    """Pallas-TPU BarDistribution.forward (mean_prediction_logits=None path).

    logits: (..., num_bars), any float dtype (streamed natively, upcast in-kernel).
    y     : any shape with prod(shape) == prod(logits.shape[:-1]).
    Returns float32 nll of shape logits.shape[:-1]; NaN targets contribute 0.
    Requires strictly increasing borders (as the PyTorch module does).
    """
    num_bars = logits.shape[-1]
    lead_shape = logits.shape[:-1]
    N = int(math.prod(lead_shape))
    in_bytes = jnp.dtype(logits.dtype).itemsize

    try:
        vmem_cap = int(getattr(pltpu.get_tpu_info(), "vmem_capacity_bytes",
                               64 * 1024 * 1024))
    except Exception:
        vmem_cap = 64 * 1024 * 1024

    n128 = ((N + 127) // 128) * 128
    tr = _pick_tile_rows(n128, num_bars, in_bytes, max_tile_rows, vmem_cap // 3)
    groups = tr // 128
    grid = n128 // tr

    # Native dtype, no wrapper upcast.  If N is not 128-aligned, the last grid
    # step reads a few edge-padded/undefined logits rows; every reduction is
    # per-row (lane axis) so they cannot leak, and they are sliced off below.
    logits2d = logits.reshape(N, num_bars)

    y_flat = jnp.asarray(y, jnp.float32).reshape(N)
    if n128 != N:
        y_flat = jnp.pad(y_flat, (0, n128 - N))
    y3 = y_flat.reshape(grid, tr, 1)                     # sublane-oriented

    borders_f32 = jnp.asarray(borders, jnp.float32)
    lower_row = borders_f32[:-1].reshape(1, num_bars)
    upper_row = borders_f32[1:].reshape(1, num_bars)
    logw_row = jnp.log(borders_f32[1:] - borders_f32[:-1]).reshape(1, num_bars)

    kernel = functools.partial(_bar_nll_kernel, num_bars=num_bars, groups=groups)

    out3 = pl.pallas_call(
        kernel,
        out_shape=jax.ShapeDtypeStruct((grid, groups, 128), jnp.float32),
        grid_spec=pltpu.PrefetchScalarGridSpec(
            num_scalar_prefetch=0,
            grid=(grid,),
            in_specs=[
                pl.BlockSpec((tr, num_bars), lambda i: (i, 0)),
                pl.BlockSpec((None, tr, 1), lambda i: (i, 0, 0)),
                pl.BlockSpec((1, num_bars), lambda i: (0, 0)),
                pl.BlockSpec((1, num_bars), lambda i: (0, 0)),
                pl.BlockSpec((1, num_bars), lambda i: (0, 0)),
            ],
            out_specs=pl.BlockSpec((None, groups, 128), lambda i: (i, 0, 0)),
        ),
        compiler_params=pltpu.CompilerParams(
            dimension_semantics=("parallel",),
            vmem_limit_bytes=vmem_cap // 2,
        ),
        cost_estimate=pl.CostEstimate(
            flops=8 * N * num_bars,
            transcendentals=N * num_bars + 2 * N,
            bytes_accessed=N * num_bars * in_bytes + 8 * N + 12 * num_bars,
        ),
    )(logits2d, y3, lower_row, upper_row, logw_row)

    return out3.reshape(-1)[:N].reshape(lead_shape)


def _reference_forward(logits, y, borders):
    """Plain-JAX reference mirroring BarDistribution.forward."""
    num_bars = logits.shape[-1]
    lead_shape = logits.shape[:-1]
    y = y.reshape(lead_shape)
    ignore_mask = jnp.isnan(y)
    y = jnp.where(ignore_mask, borders[0], y)
    cnt = jnp.sum(borders[None, :] < y.reshape(-1, 1), axis=-1).reshape(lead_shape)
    target = cnt - 1
    target = jnp.where(y == borders[0], 0, target)
    target = jnp.where(y == borders[-1], num_bars - 1, target)
    logp = jax.nn.log_softmax(logits.astype(jnp.float32), axis=-1)
    scaled = logp - jnp.log(borders[1:] - borders[:-1])
    nll = -jnp.take_along_axis(scaled, target[..., None], axis=-1)[..., 0]
    return jnp.where(ignore_mask, 0.0, nll)


if __name__ == "__main__":
    key = jax.random.PRNGKey(0)
    k1, k2, k3, k4, k5, k6 = jax.random.split(key, 6)

    num_bars = 128
    borders = jnp.linspace(-1.0, 1.0, num_bars + 1, dtype=jnp.float32)

    # --- Test 1: (seq=64, batch=4) -> N=256: tr=128, grid=2 (>=2 steps). ---
    seq, batch = 64, 4
    logits = jax.random.normal(k1, (seq, batch, num_bars), dtype=jnp.float32)
    y = jax.random.uniform(k2, (seq, batch), dtype=jnp.float32,
                           minval=-0.99, maxval=0.99)
    y = y.at[0, 0].set(jnp.nan)          # ignore-nan path
    y = y.at[1, 0].set(borders[0])       # exact lower border
    y = y.at[2, 1].set(borders[-1])      # exact upper border
    ref = _reference_forward(logits, y, borders)
    nll = jax.block_until_ready(bar_distribution_forward(logits, y, borders))
    assert nll.shape == (seq, batch)
    assert jnp.allclose(nll, ref, atol=1e-5, rtol=1e-5), (nll, ref)

    # --- Test 2: (seq=128, batch=8) -> N=1024: tr=512, groups=4, grid=2. ---
    seq2, batch2 = 128, 8
    logits2 = jax.random.normal(k3, (seq2, batch2, num_bars), dtype=jnp.float32)
    y2 = jax.random.uniform(k4, (seq2, batch2), dtype=jnp.float32,
                            minval=-0.99, maxval=0.99)
    y2 = y2.at[0, 0].set(jnp.nan)
    y2 = y2.at[3, 2].set(borders[0])
    y2 = y2.at[5, 7].set(borders[-1])
    ref2 = _reference_forward(logits2, y2, borders)
    nll2 = jax.block_until_ready(bar_distribution_forward(logits2, y2, borders))
    assert jnp.allclose(nll2, ref2, atol=1e-5, rtol=1e-5), (nll2, ref2)

    # --- Test 3: bf16 logits streamed natively, upcast inside the kernel. ---
    logits_bf16 = logits.astype(jnp.bfloat16)
    ref_bf16 = _reference_forward(logits_bf16, y, borders)
    nll_bf16 = jax.block_until_ready(
        bar_distribution_forward(logits_bf16, y, borders))
    assert jnp.allclose(nll_bf16, ref_bf16, atol=1e-4, rtol=1e-4), (nll_bf16, ref_bf16)

    # --- Test 4: small tile override (multi-grid-step, groups=1 path). ---
    nll_small = jax.block_until_ready(
        bar_distribution_forward(logits2, y2, borders, max_tile_rows=128))
    assert jnp.allclose(nll_small, ref2, atol=1e-5, rtol=1e-5), (nll_small, ref2)

    # --- Test 5: non-128-aligned row count (edge block + wrapper slicing). ---
    seq3, batch3 = 10, 3
    logits3 = jax.random.normal(k5, (seq3, batch3, num_bars), dtype=jnp.float32)
    y3 = jax.random.uniform(k6, (seq3, batch3), dtype=jnp.float32,
                            minval=-0.99, maxval=0.99)
    y3 = y3.at[4, 1].set(jnp.nan)
    ref3 = _reference_forward(logits3, y3, borders)
    nll3 = jax.block_until_ready(bar_distribution_forward(logits3, y3, borders))
    assert jnp.allclose(nll3, ref3, atol=1e-5, rtol=1e-5), (nll3, ref3)

    print("KERNEL_OK")
</pallas_src>

<mosaic_0001>
module attributes {stable_mosaic.version = 11 : i64} {
  func.func @_bar_nll_kernel(%arg0: i32, %arg1: memref<128x128xf32, #tpu.memory_space<vmem>>, %arg2: memref<1x128x1xf32, #tpu.memory_space<vmem>>, %arg3: memref<1x128xf32, #tpu.memory_space<vmem>>, %arg4: memref<1x128xf32, #tpu.memory_space<vmem>>, %arg5: memref<1x128xf32, #tpu.memory_space<vmem>>, %arg6: memref<1x1x128xf32, #tpu.memory_space<vmem>>) attributes {dimension_semantics = [#tpu.dimension_semantics<parallel>], iteration_bounds = array<i64: 2>, scalar_prefetch = 0 : i64, scratch_operands = 0 : i64, tpu.core_type = #tpu.core_type<tc>, window_params = [{transform_indices = @transform_0, window_bounds = array<i64: 128, 128>}, {transform_indices = @transform_1, window_bounds = array<i64: 1, 128, 1>}, {pipeline_mode = #tpu.pipeline_mode<synchronous>, transform_indices = @transform_2, window_bounds = array<i64: 1, 128>}, {pipeline_mode = #tpu.pipeline_mode<synchronous>, transform_indices = @transform_3, window_bounds = array<i64: 1, 128>}, {pipeline_mode = #tpu.pipeline_mode<synchronous>, transform_indices = @transform_4, window_bounds = array<i64: 1, 128>}, {transform_indices = @transform_5, window_bounds = array<i64: 1, 1, 128>}]} {
    %c0 = arith.constant 0 : index
    %c0_0 = arith.constant 0 : index
    %0 = vector.load %arg3[%c0, %c0_0] : memref<1x128xf32, #tpu.memory_space<vmem>>, vector<1x128xf32>
    %c0_1 = arith.constant 0 : index
    %c0_2 = arith.constant 0 : index
    %1 = vector.load %arg4[%c0_1, %c0_2] : memref<1x128xf32, #tpu.memory_space<vmem>>, vector<1x128xf32>
    %c0_3 = arith.constant 0 : index
    %c0_4 = arith.constant 0 : index
    %2 = vector.load %arg5[%c0_3, %c0_4] : memref<1x128xf32, #tpu.memory_space<vmem>>, vector<1x128xf32>
    %3 = tpu.iota {dimensions = array<i32: 0>} : vector<128x128xi32>
    %4 = tpu.iota {dimensions = array<i32: 1>} : vector<128x128xi32>
    %5 = arith.cmpi eq, %3, %4 : vector<128x128xi32>
    %6 = tpu.iota {dimensions = array<i32: 1>} : vector<1x128xi32>
    %c0_i32 = arith.constant 0 : i32
    %7 = vector.broadcast %c0_i32 : i32 to vector<1x128xi32>
    %8 = arith.cmpi eq, %6, %7 : vector<1x128xi32>
    %c127_i32 = arith.constant 127 : i32
    %9 = vector.broadcast %c127_i32 : i32 to vector<1x128xi32>
    %10 = arith.cmpi eq, %6, %9 : vector<1x128xi32>
    %c0_i32_5 = arith.constant 0 : i32
    %c128_i32 = arith.constant 128 : i32
    %11 = arith.muli %c0_i32_5, %c128_i32 : i32
    %12 = tpu.assume_multiple %11, 128 : i32
    %13 = arith.index_cast %12 : i32 to index
    %c0_6 = arith.constant 0 : index
    %14 = vector.load %arg1[%13, %c0_6] : memref<128x128xf32, #tpu.memory_space<vmem>>, vector<128x128xf32>
    %c0_7 = arith.constant 0 : index
    %15 = arith.index_cast %12 : i32 to index
    %c0_8 = arith.constant 0 : index
    %16 = vector.load %arg2[%c0_7, %15, %c0_8] : memref<1x128x1xf32, #tpu.memory_space<vmem>>, vector<1x128x1xf32>
    %17 = vector.shape_cast %16 : vector<1x128x1xf32> to vector<128x1xf32>
    %18 = arith.cmpf one, %17, %17 : vector<128x1xf32>
    %19 = vector.broadcast %17 : vector<128x1xf32> to vector<128x128xf32>
    %20 = vector.broadcast %0 : vector<1x128xf32> to vector<128x128xf32>
    %21 = arith.cmpf ogt, %19, %20 : vector<128x128xf32>
    %22 = vector.broadcast %17 : vector<128x1xf32> to vector<128x128xf32>
    %23 = vector.broadcast %1 : vector<1x128xf32> to vector<128x128xf32>
    %24 = arith.cmpf ole, %22, %23 : vector<128x128xf32>
    %25 = arith.andi %21, %24 : vector<128x128xi1>
    %26 = vector.extract_strided_slice %21 {offsets = [0, 0], sizes = [128, 1], strides = [1, 1]} : vector<128x128xi1> to vector<128x1xi1>
    %cst = arith.constant dense<true> : vector<128x1xi1>
    %27 = arith.xori %26, %cst : vector<128x1xi1>
    %28 = vector.broadcast %8 : vector<1x128xi1> to vector<128x128xi1>
    %29 = vector.broadcast %27 : vector<128x1xi1> to vector<128x128xi1>
    %30 = arith.andi %28, %29 : vector<128x128xi1>
    %31 = arith.ori %25, %30 : vector<128x128xi1>
    %32 = vector.extract_strided_slice %24 {offsets = [0, 127], sizes = [128, 1], strides = [1, 1]} : vector<128x128xi1> to vector<128x1xi1>
    %cst_9 = arith.constant dense<true> : vector<128x1xi1>
    %33 = arith.xori %32, %cst_9 : vector<128x1xi1>
    %34 = vector.broadcast %10 : vector<1x128xi1> to vector<128x128xi1>
    %35 = vector.broadcast %33 : vector<128x1xi1> to vector<128x128xi1>
    %36 = arith.andi %34, %35 : vector<128x128xi1>
    %37 = arith.ori %31, %36 : vector<128x128xi1>
    %cst_10 = arith.constant dense<0xFF800000> : vector<128xf32>
    %38 = vector.multi_reduction <maximumf>, %14, %cst_10 [1] : vector<128x128xf32> to vector<128xf32>
    %39 = vector.shape_cast %38 : vector<128xf32> to vector<128x1xf32>
    %40 = vector.broadcast %39 : vector<128x1xf32> to vector<128x128xf32>
    %41 = arith.subf %14, %40 : vector<128x128xf32>
    %42 = math.exp %41 : vector<128x128xf32>
    %cst_11 = arith.constant dense<0.000000e+00> : vector<128xf32>
    %43 = vector.multi_reduction <add>, %42, %cst_11 [1] : vector<128x128xf32> to vector<128xf32>
    %44 = vector.shape_cast %43 : vector<128xf32> to vector<128x1xf32>
    %45 = vector.broadcast %2 : vector<1x128xf32> to vector<128x128xf32>
    %46 = arith.subf %14, %45 : vector<128x128xf32>
    %cst_12 = arith.constant 0.000000e+00 : f32
    %47 = vector.broadcast %cst_12 : f32 to vector<128x128xf32>
    %48 = arith.select %37, %46, %47 : vector<128x128xi1>, vector<128x128xf32>
    %cst_13 = arith.constant dense<0.000000e+00> : vector<128xf32>
    %49 = vector.multi_reduction <add>, %48, %cst_13 [1] : vector<128x128xf32> to vector<128xf32>
    %50 = vector.shape_cast %49 : vector<128xf32> to vector<128x1xf32>
    %51 = math.log %44 : vector<128x1xf32>
    %52 = arith.addf %39, %51 : vector<128x1xf32>
    %53 = arith.subf %52, %50 : vector<128x1xf32>
    %cst_14 = arith.constant 0.000000e+00 : f32
    %54 = vector.broadcast %cst_14 : f32 to vector<128x1xf32>
    %55 = arith.select %18, %54, %53 : vector<128x1xi1>, vector<128x1xf32>
    %cst_15 = arith.constant 0.000000e+00 : f32
    %56 = vector.shape_cast %55 : vector<128x1xf32> to vector<128x1xf32>
    %57 = vector.broadcast %56 : vector<128x1xf32> to vector<128x128xf32>
    %58 = vector.broadcast %cst_15 : f32 to vector<128x128xf32>
    %59 = arith.select %5, %57, %58 : vector<128x128xi1>, vector<128x128xf32>
    %cst_16 = arith.constant dense<0.000000e+00> : vector<128xf32>
    %60 = vector.multi_reduction <add>, %59, %cst_16 [0] : vector<128x128xf32> to vector<128xf32>
    %61 = vector.shape_cast %60 : vector<128xf32> to vector<1x128xf32>
    %c0_17 = arith.constant 0 : index
    %62 = arith.index_cast %c0_i32_5 : i32 to index
    %c0_18 = arith.constant 0 : index
    %63 = vector.load %arg6[%c0_17, %62, %c0_18] : memref<1x1x128xf32, #tpu.memory_space<vmem>>, vector<1x1x128xf32>
    %64 = vector.shape_cast %63 : vector<1x1x128xf32> to vector<1x128xf32>
    %65 = vector.shape_cast %61 : vector<1x128xf32> to vector<1x1x128xf32>
    tpu.vector_store %arg6[%c0_17, %62, %c0_18], %65 {strides = array<i32>} : memref<1x1x128xf32, #tpu.memory_space<vmem>>, vector<1x1x128xf32>,
    %c1_i32 = arith.constant 1 : i32
    return
  }
  func.func @transform_0(%arg0: i32) -> (i32, i32) {
    %c0_i32 = arith.constant 0 : i32
    %c0_i32_0 = arith.constant 0 : i32
    return %arg0, %c0_i32 : i32, i32
  }
  func.func @transform_1(%arg0: i32) -> (i32, i32, i32) {
    %c0_i32 = arith.constant 0 : i32
    %c0_i32_0 = arith.constant 0 : i32
    %c0_i32_1 = arith.constant 0 : i32
    return %arg0, %c0_i32, %c0_i32_0 : i32, i32, i32
  }
  func.func @transform_2(%arg0: i32) -> (i32, i32) {
    %c0_i32 = arith.constant 0 : i32
    %c0_i32_0 = arith.constant 0 : i32
    %c0_i32_1 = arith.constant 0 : i32
    return %c0_i32, %c0_i32_0 : i32, i32
  }
  func.func @transform_3(%arg0: i32) -> (i32, i32) {
    %c0_i32 = arith.constant 0 : i32
    %c0_i32_0 = arith.constant 0 : i32
    %c0_i32_1 = arith.constant 0 : i32
    return %c0_i32, %c0_i32_0 : i32, i32
  }
  func.func @transform_4(%arg0: i32) -> (i32, i32) {
    %c0_i32 = arith.constant 0 : i32
    %c0_i32_0 = arith.constant 0 : i32
    %c0_i32_1 = arith.constant 0 : i32
    return %c0_i32, %c0_i32_0 : i32, i32
  }
  func.func @transform_5(%arg0: i32) -> (i32, i32, i32) {
    %c0_i32 = arith.constant 0 : i32
    %c0_i32_0 = arith.constant 0 : i32
    %c0_i32_1 = arith.constant 0 : i32
    return %arg0, %c0_i32, %c0_i32_0 : i32, i32, i32
  }
}

</mosaic_0001>

<llo_original>
// kernel: tpu_custom_call.1
$region0: #{tpu_custom_call.1}
  #allocation0 [shape = 'u32[]', space=smem, size = 0x4, offset = 0x4, fixed_abs, tag = 'smem constant byte address 0x4 - core index']
  #allocation1 [shape = 'u32[144,128]{1,0:T(1,128)}', space=vmem, size = 0x12000, scoped, tag = 'internal scratch']
  %s0 = inlined_call_operand.vmem [shape: f32[256,128], index: 0, kind: input, shape index: {}]
  %s1 = inlined_call_operand.vmem [shape: f32[2,128,1], index: 1, kind: input, shape index: {}]
  %s2 = inlined_call_operand.vmem [shape: f32[1,128], index: 2, kind: input, shape index: {}]
  %s3 = inlined_call_operand.vmem [shape: f32[1,128], index: 3, kind: input, shape index: {}]
  %s4 = inlined_call_operand.vmem [shape: f32[1,128], index: 4, kind: input, shape index: {}]
  %s5 = inlined_call_operand.hbm [shape: f32[2,1,128], index: 5, kind: output, shape index: {}]
  %s6 = sld [smem:[#allocation0]]
  $region53: #{tpu_custom_call.1} parent=0
    _
  %s8 = ssub.s32 1, %s6
  %s9 = scalar_select 0, %s8, %s6
  $region1: #{tpu_custom_call.1} parent=0
    #allocation2 [shape = 'u8[1024]{0}', space=vmem, size = 0x400, scoped, tag = 'output window, operand 0']
    #allocation3 [shape = 's32[2]{0}', space=sflag, size = 0x8, scoped, tag = 'scoped memory for tpu_custom_call.1']
    %10 = vsyncpa [#allocation3], 0
    %s11 = scalar_lea.sflag [#allocation3], 1
    %12 = vsyncpa %s11, 0
    loop: start=0, step=1, limit=4
    $region2: #{tpu_custom_call.1} parent=1 // loop_pre_header
      _
    $region3: #{tpu_custom_call.1} parent=1 // loop_header
      %s14 = sphi 0, %s18
      %p15 = scmp.ge.s32.totalorder %s14, 4
      %s24 = sphi 0, %s26
      %s27 = sphi 0, %s24
      %s28 = sphi 0, %s27
      %s44 = sphi 0, %s28
      %s50 = sphi 0, %s52
      %s53 = sphi 0, %s50
      %s54 = sphi 0, %s53
      %s70 = sphi 0, %s54
      %s74 = sphi 0, %s74
      %s76 = sphi 0, %s74
      %s77 = sphi 0, %s76
      %s91 = sphi 0, %s77
      %s95 = sphi 0, %s95
      %s97 = sphi 0, %s95
      %s98 = sphi 0, %s97
      %s112 = sphi 0, %s98
      %s116 = sphi 0, %s116
      %s118 = sphi 0, %s116
      %s119 = sphi 0, %s118
      %s133 = sphi 0, %s119
      %s139 = sphi 0, %s141
      %s142 = sphi 0, %s139
      %s143 = sphi 0, %s142
      %s159 = sphi 0, %s143
    $region4: #{tpu_custom_call.1} parent=1 // loop_header_branch
      %17 = sbr.rel (%p15) target = $region8
    $region5: #{tpu_custom_call.1} parent=1 // loop_body
      %s19 = ssub.s32 %s14, 1
      %s20 = ssub.s32 %s14, 2
      %s21 = sadd.s32 %s14, 1
      %s22 = ssub.s32 %s14, %s21
      %p23 = scmp.eq.s32.totalorder %s22, 0
      %s25 = sadd.s32 %s24, 1
      %s26 = scalar_select %p23, %s24, %s25
      %p29 = pneg %p23
      %p30 = scmp.eq.s32.totalorder %s14, 1
      %p31 = por %p29, %p30
      %p32 = scmp.ne.s32.totalorder %s24, %s27
      %p33 = scmp.eq.s32.totalorder %s14, 0
      %p34 = por %p32, %p33
      %p35 = scmp.ne.s32.totalorder %s24, %s27
      %p36 = scmp.eq.s32.totalorder %s19, 1
      %p37 = por %p35, %p36
      %p38 = scmp.ne.s32.totalorder %s27, %s28
      %p39 = scmp.eq.s32.totalorder %s19, 0
      %p40 = por %p38, %p39
      %p41 = scmp.ne.s32.totalorder %s27, %s28
      %p42 = scmp.eq.s32.totalorder %s20, 1
      %p43 = por %p41, %p42
      %p45 = scmp.ne.s32.totalorder %s28, %s44
      %p46 = scmp.eq.s32.totalorder %s20, 0
      %p47 = por %p45, %p46
      %s48 = ssub.s32 %s14, %s21
      %p49 = scmp.eq.s32.totalorder %s48, 0
      %s51 = sadd.s32 %s50, 1
      %s52 = scalar_select %p49, %s50, %s51
      %p55 = pneg %p49
      %p56 = scmp.eq.s32.totalorder %s14, 1
      %p57 = por %p55, %p56
      %p58 = scmp.ne.s32.totalorder %s50, %s53
      %p59 = scmp.eq.s32.totalorder %s14, 0
      %p60 = por %p58, %p59
      %p61 = scmp.ne.s32.totalorder %s50, %s53
      %p62 = scmp.eq.s32.totalorder %s19, 1
      %p63 = por %p61, %p62
      %p64 = scmp.ne.s32.totalorder %s53, %s54
      %p65 = scmp.eq.s32.totalorder %s19, 0
      %p66 = por %p64, %p65
      %p67 = scmp.ne.s32.totalorder %s53, %s54
      %p68 = scmp.eq.s32.totalorder %s20, 1
      %p69 = por %p67, %p68
      %p71 = scmp.ne.s32.totalorder %s54, %s70
      %p72 = scmp.eq.s32.totalorder %s20, 0
      %p73 = por %p71, %p72
      %s75 = sadd.s32 %s74, 1
      %p78 = scmp.eq.s32.totalorder %s14, 1
      %p79 = scmp.ne.s32.totalorder %s74, %s76
      %p80 = scmp.eq.s32.totalorder %s14, 0
      %p81 = por %p79, %p80
      %p82 = scmp.ne.s32.totalorder %s74, %s76
      %p83 = scmp.eq.s32.totalorder %s19, 1
      %p84 = por %p82, %p83
      %p85 = scmp.ne.s32.totalorder %s76, %s77
      %p86 = scmp.eq.s32.totalorder %s19, 0
      %p87 = por %p85, %p86
      %p88 = scmp.ne.s32.totalorder %s76, %s77
      %p89 = scmp.eq.s32.totalorder %s20, 1
      %p90 = por %p88, %p89
      %p92 = scmp.ne.s32.totalorder %s77, %s91
      %p93 = scmp.eq.s32.totalorder %s20, 0
      %p94 = por %p92, %p93
      %s96 = sadd.s32 %s95, 1
      %p99 = scmp.eq.s32.totalorder %s14, 1
      %p100 = scmp.ne.s32.totalorder %s95, %s97
      %p101 = scmp.eq.s32.totalorder %s14, 0
      %p102 = por %p100, %p101
      %p103 = scmp.ne.s32.totalorder %s95, %s97
      %p104 = scmp.eq.s32.totalorder %s19, 1
      %p105 = por %p103, %p104
      %p106 = scmp.ne.s32.totalorder %s97, %s98
      %p107 = scmp.eq.s32.totalorder %s19, 0
      %p108 = por %p106, %p107
      %p109 = scmp.ne.s32.totalorder %s97, %s98
      %p110 = scmp.eq.s32.totalorder %s20, 1
      %p111 = por %p109, %p110
      %p113 = scmp.ne.s32.totalorder %s98, %s112
      %p114 = scmp.eq.s32.totalorder %s20, 0
      %p115 = por %p113, %p114
      %s117 = sadd.s32 %s116, 1
      %p120 = scmp.eq.s32.totalorder %s14, 1
      %p121 = scmp.ne.s32.totalorder %s116, %s118
      %p122 = scmp.eq.s32.totalorder %s14, 0
      %p123 = por %p121, %p122
      %p124 = scmp.ne.s32.totalorder %s116, %s118
      %p125 = scmp.eq.s32.totalorder %s19, 1
      %p126 = por %p124, %p125
      %p127 = scmp.ne.s32.totalorder %s118, %s119
      %p128 = scmp.eq.s32.totalorder %s19, 0
      %p129 = por %p127, %p128
      %p130 = scmp.ne.s32.totalorder %s118, %s119
      %p131 = scmp.eq.s32.totalorder %s20, 1
      %p132 = por %p130, %p131
      %p134 = scmp.ne.s32.totalorder %s119, %s133
      %p135 = scmp.eq.s32.totalorder %s20, 0
      %p136 = por %p134, %p135
      %s137 = ssub.s32 %s14, %s21
      %p138 = scmp.eq.s32.totalorder %s137, 0
      %s140 = sadd.s32 %s139, 1
      %s141 = scalar_select %p138, %s139, %s140
      %p144 = pneg %p138
      %p145 = scmp.eq.s32.totalorder %s14, 1
      %p146 = por %p144, %p145
      %p147 = scmp.ne.s32.totalorder %s139, %s142
      %p148 = scmp.eq.s32.totalorder %s14, 0
      %p149 = por %p147, %p148
      %p150 = scmp.ne.s32.totalorder %s139, %s142
      %p151 = scmp.eq.s32.totalorder %s19, 1
      %p152 = por %p150, %p151
      %p153 = scmp.ne.s32.totalorder %s142, %s143
      %p154 = scmp.eq.s32.totalorder %s19, 0
      %p155 = por %p153, %p154
      %p156 = scmp.ne.s32.totalorder %s142, %s143
      %p157 = scmp.eq.s32.totalorder %s20, 1
      %p158 = por %p156, %p157
      %p160 = scmp.ne.s32.totalorder %s143, %s159
      %p161 = scmp.eq.s32.totalorder %s20, 0
      %p162 = por %p160, %p161
      %p163 = scmp.le.s32.totalorder 1, %s14
      %p164 = scmp.lt.s32.totalorder %s14, 3
      %p165 = pnand %p163, %p164
      %p166 = pneg %p165
      // Predicated region
      $region9: #{tpu_custom_call.1} parent=5 // pred_check
        _
      $region10: #{tpu_custom_call.1} parent=5 // pred_check_branch
        %168 = sbr.rel (%p165) target = $region12
      $region11: #{tpu_custom_call.1} parent=5 // pred_region
        %s169 = ssub.s32 %s14, 1
        // Predicated region
        $region13: #{tpu_custom_call.1} parent=11 // pred_check
          %p170 = pneg %p87
        $region14: #{tpu_custom_call.1} parent=11 // pred_check_branch
          %172 = sbr.rel (%p170) target = $region16
        $region15: #{tpu_custom_call.1} parent=11 // pred_region
          _
        $region16: #{tpu_custom_call.1} parent=11 // pred_fallthru
          _
        // Predicated region
        $region17: #{tpu_custom_call.1} parent=11 // pred_check
          %p173 = pneg %p108
        $region18: #{tpu_custom_call.1} parent=11 // pred_check_branch
          %175 = sbr.rel (%p173) target = $region20
        $region19: #{tpu_custom_call.1} parent=11 // pred_region
          _
        $region20: #{tpu_custom_call.1} parent=11 // pred_fallthru
          _
        // Predicated region
        $region21: #{tpu_custom_call.1} parent=11 // pred_check
          %p176 = pneg %p129
        $region22: #{tpu_custom_call.1} parent=11 // pred_check_branch
          %178 = sbr.rel (%p176) target = $region24
        $region23: #{tpu_custom_call.1} parent=11 // pred_region
          _
        $region24: #{tpu_custom_call.1} parent=11 // pred_fallthru
          _
      $region12: #{tpu_custom_call.1} parent=5 // pred_fallthru
        _
      %p179 = scmp.lt.s32.totalorder %s14, 2
      // Predicated region
      $region25: #{tpu_custom_call.1} parent=5 // pred_check
        %p180 = pneg %p179
      $region26: #{tpu_custom_call.1} parent=5 // pred_check_branch
        %182 = sbr.rel (%p180) target = $region28
      $region27: #{tpu_custom_call.1} parent=5 // pred_region
        // Predicated region
        $region29: #{tpu_custom_call.1} parent=27 // pred_check
          %p183 = pneg %p34
        $region30: #{tpu_custom_call.1} parent=27 // pred_check_branch
          %185 = sbr.rel (%p183) target = $region32
        $region31: #{tpu_custom_call.1} parent=27 // pred_region
          %s186 = smul.u32 16, %s14
          %p187 = scmp.lt.s32.totalorder %s186, 31
          %s188 = scalar_select %p187, %s186, 31
          %s189 = smul.addr %s188, 8
          %s190 = scalar_lea.vmem %s0, %s189
          %s191 = smul.u32 16, %s14
        $region32: #{tpu_custom_call.1} parent=27 // pred_fallthru
          _
        // Predicated region
        $region33: #{tpu_custom_call.1} parent=27 // pred_check
          %p192 = pneg %p60
        $region34: #{tpu_custom_call.1} parent=27 // pred_check_branch
          %194 = sbr.rel (%p192) target = $region36
        $region35: #{tpu_custom_call.1} parent=27 // pred_region
          %p195 = scmp.lt.s32.totalorder %s14, 1
          %s196 = scalar_select %p195, %s14, 1
          %s197 = smul.addr %s196, 16
          %s198 = smul.addr %s197, 8
          %s199 = scalar_lea.vmem %s1, %s198
        $region36: #{tpu_custom_call.1} parent=27 // pred_fallthru
          _
      $region28: #{tpu_custom_call.1} parent=5 // pred_fallthru
        _
      %p200 = scmp.le.s32.totalorder 1, %s14
      %p201 = scmp.lt.s32.totalorder %s14, 3
      %p202 = pnand %p200, %p201
      %p203 = pneg %p202
      // Predicated region
      $region37: #{tpu_custom_call.1} parent=5 // pred_check
        _
      $region38: #{tpu_custom_call.1} parent=5 // pred_check_branch
        %205 = sbr.rel (%p202) target = $region40
      $region39: #{tpu_custom_call.1} parent=5 // pred_region
        %s206 = ssub.s32 %s14, 1
        %s207 = smul.u32 16, %s19
        %p208 = scmp.lt.s32.totalorder %s207, 31
        %s209 = scalar_select %p208, %s207, 31
        %s210 = smul.addr %s209, 8
        %s211 = scalar_lea.vmem %s0, %s210
        %p212 = pneg %p40
        %p213 = pneg %p37
        %p214 = scmp.lt.s32.totalorder %s19, 1
        %s215 = scalar_select %p214, %s19, 1
        %s216 = smul.addr %s215, 16
        %s217 = smul.addr %s216, 8
        %s218 = scalar_lea.vmem %s1, %s217
        %p219 = pneg %p66
        %p220 = pneg %p63
        %p221 = pneg %p87
        %p222 = pneg %p84
        %p223 = pneg %p108
        %p224 = pneg %p105
        %p225 = pneg %p129
        %p226 = pneg %p126
        %p227 = pneg %p155
        %p228 = pneg %p152
        %s229 = sand.u32 %s142, 1
        %s230 = scalar_lea.sflag [#allocation3], %s229
        %s231 = sand.u32 %s142, 1
        %s232 = scalar_lea.vmem [#allocation2], %s231
        %s233 = smul.u32 16, %s19
        %p234 = scmp.lt.s32.totalorder %s233, 31
        %s235 = scalar_select %p234, %s233, 31
        %s236 = smul.addr %s235, 8
        %s237 = scalar_lea.vmem %s0, %s236
        %s238 = smul.u32 16, %s19
        %p239 = scmp.lt.s32.totalorder %s19, 1
        %s240 = scalar_select %p239, %s19, 1
        %s241 = smul.addr %s240, 16
        %s242 = smul.addr %s241, 8
        %s243 = scalar_lea.vmem %s1, %s242
        %v244 = vld [vmem:[%s2] sm:$0x1]
        %v245 = vld [vmem:[%s3] sm:$0x1]
        %v246 = vld [vmem:[%s4] sm:$0x1]
        %v247 = vlaneseq
        %v248 = vshrl.u32 %v247, 7
        %v249 = vadd.s32 %v248, 8
        %v250 = vadd.s32 %v248, 16
        %v251 = vadd.s32 %v248, 24
        %v252 = vadd.s32 %v248, 32
        %v253 = vadd.s32 %v248, 40
        %v254 = vadd.s32 %v248, 48
        %v255 = vadd.s32 %v248, 56
        %v256 = vadd.s32 %v248, 64
        %v257 = vadd.s32 %v248, 72
        %v258 = vadd.s32 %v248, 80
        %v259 = vadd.s32 %v248, 88
        %v260 = vadd.s32 %v248, 96
        %v261 = vadd.s32 %v248, 104
        %v262 = vadd.s32 %v248, 112
        %v263 = vadd.s32 %v248, 120
        %v264 = vlaneseq
        %v265 = vand.u32 %v264, 127
        %vm266 = vcmp.eq.s32.totalorder %v248, %v265
        %vm267 = vcmp.eq.s32.totalorder %v249, %v265
        %vm268 = vcmp.eq.s32.totalorder %v250, %v265
        %vm269 = vcmp.eq.s32.totalorder %v251, %v265
        %vm270 = vcmp.eq.s32.totalorder %v252, %v265
        %vm271 = vcmp.eq.s32.totalorder %v253, %v265
        %vm272 = vcmp.eq.s32.totalorder %v254, %v265
        %vm273 = vcmp.eq.s32.totalorder %v255, %v265
        %vm274 = vcmp.eq.s32.totalorder %v256, %v265
        %vm275 = vcmp.eq.s32.totalorder %v257, %v265
        %vm276 = vcmp.eq.s32.totalorder %v258, %v265
        %vm277 = vcmp.eq.s32.totalorder %v259, %v265
        %vm278 = vcmp.eq.s32.totalorder %v260, %v265
        %vm279 = vcmp.eq.s32.totalorder %v261, %v265
        %vm280 = vcmp.eq.s32.totalorder %v262, %v265
        %vm281 = vcmp.eq.s32.totalorder %v263, %v265
        %vm282 = vcmp.eq.s32.totalorder %v265, 0
        %vm283 = vcmp.eq.s32.totalorder %v265, 127
        %v284 = vld [vmem:[%s237] sm:$0xff]
        %v285 = vld [vmem:[%s237 + $0x8] sm:$0xff]
        %v286 = vld [vmem:[%s237 + $0x10] sm:$0xff]
        %v287 = vld [vmem:[%s237 + $0x18] sm:$0xff]
        %v288 = vld [vmem:[%s237 + $0x20] sm:$0xff]
        %v289 = vld [vmem:[%s237 + $0x28] sm:$0xff]
        %v290 = vld [vmem:[%s237 + $0x30] sm:$0xff]
        %v291 = vld [vmem:[%s237 + $0x38] sm:$0xff]
        %v292 = vld [vmem:[%s237 + $0x40] sm:$0xff]
        %v293 = vld [vmem:[%s237 + $0x48] sm:$0xff]
        %v294 = vld [vmem:[%s237 + $0x50] sm:$0xff]
        %v295 = vld [vmem:[%s237 + $0x58] sm:$0xff]
        %v296 = vld [vmem:[%s237 + $0x60] sm:$0xff]
        %v297 = vld [vmem:[%s237 + $0x68] sm:$0xff]
        %v298 = vld [vmem:[%s237 + $0x70] sm:$0xff]
        %v299 = vld [vmem:[%s237 + $0x78] sm:$0xff]
        %v300 = vld [vmem:[%s243] sm:$0xff]
        %v301 = vld [vmem:[%s243 + $0x8] sm:$0xff]
        %v302 = vld [vmem:[%s243 + $0x10] sm:$0xff]
        %v303 = vld [vmem:[%s243 + $0x18] sm:$0xff]
        %v304 = vld [vmem:[%s243 + $0x20] sm:$0xff]
        %v305 = vld [vmem:[%s243 + $0x28] sm:$0xff]
        %v306 = vld [vmem:[%s243 + $0x30] sm:$0xff]
        %v307 = vld [vmem:[%s243 + $0x38] sm:$0xff]
        %v308 = vld [vmem:[%s243 + $0x40] sm:$0xff]
        %v309 = vld [vmem:[%s243 + $0x48] sm:$0xff]
        %v310 = vld [vmem:[%s243 + $0x50] sm:$0xff]
        %v311 = vld [vmem:[%s243 + $0x58] sm:$0xff]
        %v312 = vld [vmem:[%s243 + $0x60] sm:$0xff]
        %v313 = vld [vmem:[%s243 + $0x68] sm:$0xff]
        %v314 = vld [vmem:[%s243 + $0x70] sm:$0xff]
        %v315 = vld [vmem:[%s243 + $0x78] sm:$0xff]
        %vm316 = vcmp.ne.f32.partialorder %v300, %v300
        %vm317 = vcmp.ne.f32.partialorder %v301, %v301
        %vm318 = vcmp.ne.f32.partialorder %v302, %v302
        %vm319 = vcmp.ne.f32.partialorder %v303, %v303
        %vm320 = vcmp.ne.f32.partialorder %v304, %v304
        %vm321 = vcmp.ne.f32.partialorder %v305, %v305
        %vm322 = vcmp.ne.f32.partialorder %v306, %v306
        %vm323 = vcmp.ne.f32.partialorder %v307, %v307
        %vm324 = vcmp.ne.f32.partialorder %v308, %v308
        %vm325 = vcmp.ne.f32.partialorder %v309, %v309
        %vm326 = vcmp.ne.f32.partialorder %v310, %v310
        %vm327 = vcmp.ne.f32.partialorder %v311, %v311
        %vm328 = vcmp.ne.f32.partialorder %v312, %v312
        %vm329 = vcmp.ne.f32.partialorder %v313, %v313
        %vm330 = vcmp.ne.f32.partialorder %v314, %v314
        %vm331 = vcmp.ne.f32.partialorder %v315, %v315
        %333 = vset.pattern.permute.xlu0 0
        %334 = vperm.xlu0 %333, %v300
        %v335 = vpop.permute.xlu0 %334
        %338 = vset.pattern.permute.xlu0 0
        %339 = vperm.xlu0 %338, %v301
        %v340 = vpop.permute.xlu0 %339
        %343 = vset.pattern.permute.xlu0 0
        %344 = vperm.xlu0 %343, %v302
        %v345 = vpop.permute.xlu0 %344
        %348 = vset.pattern.permute.xlu0 0
        %349 = vperm.xlu0 %348, %v303
        %v350 = vpop.permute.xlu0 %349
        %353 = vset.pattern.permute.xlu0 0
        %354 = vperm.xlu0 %353, %v304
        %v355 = vpop.permute.xlu0 %354
        %358 = vset.pattern.permute.xlu0 0
        %359 = vperm.xlu0 %358, %v305
        %v360 = vpop.permute.xlu0 %359
        %363 = vset.pattern.permute.xlu0 0
        %364 = vperm.xlu0 %363, %v306
        %v365 = vpop.permute.xlu0 %364
        %368 = vset.pattern.permute.xlu0 0
        %369 = vperm.xlu0 %368, %v307
        %v370 = vpop.permute.xlu0 %369
        %373 = vset.pattern.permute.xlu0 0
        %374 = vperm.xlu0 %373, %v308
        %v375 = vpop.permute.xlu0 %374
        %378 = vset.pattern.permute.xlu0 0
        %379 = vperm.xlu0 %378, %v309
        %v380 = vpop.permute.xlu0 %379
        %383 = vset.pattern.permute.xlu0 0
        %384 = vperm.xlu0 %383, %v310
        %v385 = vpop.permute.xlu0 %384
        %388 = vset.pattern.permute.xlu0 0
        %389 = vperm.xlu0 %388, %v311
        %v390 = vpop.permute.xlu0 %389
        %393 = vset.pattern.permute.xlu0 0
        %394 = vperm.xlu0 %393, %v312
        %v395 = vpop.permute.xlu0 %394
        %398 = vset.pattern.permute.xlu0 0
        %399 = vperm.xlu0 %398, %v313
        %v400 = vpop.permute.xlu0 %399
        %403 = vset.pattern.permute.xlu0 0
        %404 = vperm.xlu0 %403, %v314
        %v405 = vpop.permute.xlu0 %404
        %408 = vset.pattern.permute.xlu0 0
        %409 = vperm.xlu0 %408, %v315
        %v410 = vpop.permute.xlu0 %409
        %v413 = vlaneseq
        %v414 = vshrl.u32 %v413, 7
        %v415 = vsub.s32 0, %v414
        %v416 = vrot.slane %v244, %v415
        %vm418 = vcmp.gt.f32.partialorder %v335, %v416
        %vm419 = vcmp.gt.f32.partialorder %v340, %v416
        %vm420 = vcmp.gt.f32.partialorder %v345, %v416
        %vm421 = vcmp.gt.f32.partialorder %v350, %v416
        %vm422 = vcmp.gt.f32.partialorder %v355, %v416
        %vm423 = vcmp.gt.f32.partialorder %v360, %v416
        %vm424 = vcmp.gt.f32.partialorder %v365, %v416
        %vm425 = vcmp.gt.f32.partialorder %v370, %v416
        %vm426 = vcmp.gt.f32.partialorder %v375, %v416
        %vm427 = vcmp.gt.f32.partialorder %v380, %v416
        %vm428 = vcmp.gt.f32.partialorder %v385, %v416
        %vm429 = vcmp.gt.f32.partialorder %v390, %v416
        %vm430 = vcmp.gt.f32.partialorder %v395, %v416
        %vm431 = vcmp.gt.f32.partialorder %v400, %v416
        %vm432 = vcmp.gt.f32.partialorder %v405, %v416
        %vm433 = vcmp.gt.f32.partialorder %v410, %v416
        %v435 = vlaneseq
        %v436 = vshrl.u32 %v435, 7
        %v437 = vsub.s32 0, %v436
        %v438 = vrot.slane %v245, %v437
        %vm440 = vcmp.le.f32.partialorder %v335, %v438
        %vm441 = vcmp.le.f32.partialorder %v340, %v438
        %vm442 = vcmp.le.f32.partialorder %v345, %v438
        %vm443 = vcmp.le.f32.partialorder %v350, %v438
        %vm444 = vcmp.le.f32.partialorder %v355, %v438
        %vm445 = vcmp.le.f32.partialorder %v360, %v438
        %vm446 = vcmp.le.f32.partialorder %v365, %v438
        %vm447 = vcmp.le.f32.partialorder %v370, %v438
        %vm448 = vcmp.le.f32.partialorder %v375, %v438
        %vm449 = vcmp.le.f32.partialorder %v380, %v438
        %vm450 = vcmp.le.f32.partialorder %v385, %v438
        %vm451 = vcmp.le.f32.partialorder %v390, %v438
        %vm452 = vcmp.le.f32.partialorder %v395, %v438
        %vm453 = vcmp.le.f32.partialorder %v400, %v438
        %vm454 = vcmp.le.f32.partialorder %v405, %v438
        %vm455 = vcmp.le.f32.partialorder %v410, %v438
        %vm456 = vmand %vm418, %vm440
        %vm457 = vmand %vm419, %vm441
        %vm458 = vmand %vm420, %vm442
        %vm459 = vmand %vm421, %vm443
        %vm460 = vmand %vm422, %vm444
        %vm461 = vmand %vm423, %vm445
        %vm462 = vmand %vm424, %vm446
        %vm463 = vmand %vm425, %vm447
        %vm464 = vmand %vm426, %vm448
        %vm465 = vmand %vm427, %vm449
        %vm466 = vmand %vm428, %vm450
        %vm467 = vmand %vm429, %vm451
        %vm468 = vmand %vm430, %vm452
        %vm469 = vmand %vm431, %vm453
        %vm470 = vmand %vm432, %vm454
        %vm471 = vmand %vm433, %vm455
        %vm472 = vmxor %vm418, 1
        %vm473 = vmxor %vm419, 1
        %vm474 = vmxor %vm420, 1
        %vm475 = vmxor %vm421, 1
        %vm476 = vmxor %vm422, 1
        %vm477 = vmxor %vm423, 1
        %vm478 = vmxor %vm424, 1
        %vm479 = vmxor %vm425, 1
        %vm480 = vmxor %vm426, 1
        %vm481 = vmxor %vm427, 1
        %vm482 = vmxor %vm428, 1
        %vm483 = vmxor %vm429, 1
        %vm484 = vmxor %vm430, 1
        %vm485 = vmxor %vm431, 1
        %vm486 = vmxor %vm432, 1
        %vm487 = vmxor %vm433, 1
        %v488 = vsel %vm282, 1, 0
        %vm489 = vcmp.eq.s32.totalorder %v488, 1
        %v490 = vsel %vm472, 1, 0
        %v491 = vsel %vm473, 1, 0
        %v492 = vsel %vm474, 1, 0
        %v493 = vsel %vm475, 1, 0
        %v494 = vsel %vm476, 1, 0
        %v495 = vsel %vm477, 1, 0
        %v496 = vsel %vm478, 1, 0
        %v497 = vsel %vm479, 1, 0
        %v498 = vsel %vm480, 1, 0
        %v499 = vsel %vm481, 1, 0
        %v500 = vsel %vm482, 1, 0
        %v501 = vsel %vm483, 1, 0
        %v502 = vsel %vm484, 1, 0
        %v503 = vsel %vm485, 1, 0
        %v504 = vsel %vm486, 1, 0
        %v505 = vsel %vm487, 1, 0
        %506 = vset.pattern.permute.xlu0 0
        %507 = vperm.xlu0 %506, %v490
        %v508 = vpop.permute.xlu0 %507
        %509 = vset.pattern.permute.xlu0 0
        %510 = vperm.xlu0 %509, %v491
        %v511 = vpop.permute.xlu0 %510
        %512 = vset.pattern.permute.xlu0 0
        %513 = vperm.xlu0 %512, %v492
        %v514 = vpop.permute.xlu0 %513
        %515 = vset.pattern.permute.xlu0 0
        %516 = vperm.xlu0 %515, %v493
        %v517 = vpop.permute.xlu0 %516
        %518 = vset.pattern.permute.xlu0 0
        %519 = vperm.xlu0 %518, %v494
        %v520 = vpop.permute.xlu0 %519
        %521 = vset.pattern.permute.xlu0 0
        %522 = vperm.xlu0 %521, %v495
        %v523 = vpop.permute.xlu0 %522
        %524 = vset.pattern.permute.xlu0 0
        %525 = vperm.xlu0 %524, %v496
        %v526 = vpop.permute.xlu0 %525
        %527 = vset.pattern.permute.xlu0 0
        %528 = vperm.xlu0 %527, %v497
        %v529 = vpop.permute.xlu0 %528
        %530 = vset.pattern.permute.xlu0 0
        %531 = vperm.xlu0 %530, %v498
        %v532 = vpop.permute.xlu0 %531
        %533 = vset.pattern.permute.xlu0 0
        %534 = vperm.xlu0 %533, %v499
        %v535 = vpop.permute.xlu0 %534
        %536 = vset.pattern.permute.xlu0 0
        %537 = vperm.xlu0 %536, %v500
        %v538 = vpop.permute.xlu0 %537
        %539 = vset.pattern.permute.xlu0 0
        %540 = vperm.xlu0 %539, %v501
        %v541 = vpop.permute.xlu0 %540
        %542 = vset.pattern.permute.xlu0 0
        %543 = vperm.xlu0 %542, %v502
        %v544 = vpop.permute.xlu0 %543
        %545 = vset.pattern.permute.xlu0 0
        %546 = vperm.xlu0 %545, %v503
        %v547 = vpop.permute.xlu0 %546
        %548 = vset.pattern.permute.xlu0 0
        %549 = vperm.xlu0 %548, %v504
        %v550 = vpop.permute.xlu0 %549
        %551 = vset.pattern.permute.xlu0 0
        %552 = vperm.xlu0 %551, %v505
        %v553 = vpop.permute.xlu0 %552
        %vm554 = vcmp.eq.s32.totalorder %v508, 1
        %vm555 = vcmp.eq.s32.totalorder %v511, 1
        %vm556 = vcmp.eq.s32.totalorder %v514, 1
        %vm557 = vcmp.eq.s32.totalorder %v517, 1
        %vm558 = vcmp.eq.s32.totalorder %v520, 1
        %vm559 = vcmp.eq.s32.totalorder %v523, 1
        %vm560 = vcmp.eq.s32.totalorder %v526, 1
        %vm561 = vcmp.eq.s32.totalorder %v529, 1
        %vm562 = vcmp.eq.s32.totalorder %v532, 1
        %vm563 = vcmp.eq.s32.totalorder %v535, 1
        %vm564 = vcmp.eq.s32.totalorder %v538, 1
        %vm565 = vcmp.eq.s32.totalorder %v541, 1
        %vm566 = vcmp.eq.s32.totalorder %v544, 1
        %vm567 = vcmp.eq.s32.totalorder %v547, 1
        %vm568 = vcmp.eq.s32.totalorder %v550, 1
        %vm569 = vcmp.eq.s32.totalorder %v553, 1
        %vm570 = vmand %vm489, %vm554
        %vm571 = vmand %vm489, %vm555
        %vm572 = vmand %vm489, %vm556
        %vm573 = vmand %vm489, %vm557
        %vm574 = vmand %vm489, %vm558
        %vm575 = vmand %vm489, %vm559
        %vm576 = vmand %vm489, %vm560
        %vm577 = vmand %vm489, %vm561
        %vm578 = vmand %vm489, %vm562
        %vm579 = vmand %vm489, %vm563
        %vm580 = vmand %vm489, %vm564
        %vm581 = vmand %vm489, %vm565
        %vm582 = vmand %vm489, %vm566
        %vm583 = vmand %vm489, %vm567
        %vm584 = vmand %vm489, %vm568
        %vm585 = vmand %vm489, %vm569
        %vm586 = vmor %vm456, %vm570
        %vm587 = vmor %vm457, %vm571
        %vm588 = vmor %vm458, %vm572
        %vm589 = vmor %vm459, %vm573
        %vm590 = vmor %vm460, %vm574
        %vm591 = vmor %vm461, %vm575
        %vm592 = vmor %vm462, %vm576
        %vm593 = vmor %vm463, %vm577
        %vm594 = vmor %vm464, %vm578
        %vm595 = vmor %vm465, %vm579
        %vm596 = vmor %vm466, %vm580
        %vm597 = vmor %vm467, %vm581
        %vm598 = vmor %vm468, %vm582
        %vm599 = vmor %vm469, %vm583
        %vm600 = vmor %vm470, %vm584
        %vm601 = vmor %vm471, %vm585
        %vm602 = vmxor %vm440, 1
        %vm603 = vmxor %vm441, 1
        %vm604 = vmxor %vm442, 1
        %vm605 = vmxor %vm443, 1
        %vm606 = vmxor %vm444, 1
        %vm607 = vmxor %vm445, 1
        %vm608 = vmxor %vm446, 1
        %vm609 = vmxor %vm447, 1
        %vm610 = vmxor %vm448, 1
        %vm611 = vmxor %vm449, 1
        %vm612 = vmxor %vm450, 1
        %vm613 = vmxor %vm451, 1
        %vm614 = vmxor %vm452, 1
        %vm615 = vmxor %vm453, 1
        %vm616 = vmxor %vm454, 1
        %vm617 = vmxor %vm455, 1
        %v618 = vsel %vm283, 1, 0
        %vm619 = vcmp.eq.s32.totalorder %v618, 1
        %v620 = vsel %vm602, 1, 0
        %v621 = vsel %vm603, 1, 0
        %v622 = vsel %vm604, 1, 0
        %v623 = vsel %vm605, 1, 0
        %v624 = vsel %vm606, 1, 0
        %v625 = vsel %vm607, 1, 0
        %v626 = vsel %vm608, 1, 0
        %v627 = vsel %vm609, 1, 0
        %v628 = vsel %vm610, 1, 0
        %v629 = vsel %vm611, 1, 0
        %v630 = vsel %vm612, 1, 0
        %v631 = vsel %vm613, 1, 0
        %v632 = vsel %vm614, 1, 0
        %v633 = vsel %vm615, 1, 0
        %v634 = vsel %vm616, 1, 0
        %v635 = vsel %vm617, 1, 0
        %636 = vset.pattern.permute.xlu0 127
        %637 = vperm.xlu0 %636, %v620
        %v638 = vpop.permute.xlu0 %637
        %639 = vset.pattern.permute.xlu0 127
        %640 = vperm.xlu0 %639, %v621
        %v641 = vpop.permute.xlu0 %640
        %642 = vset.pattern.permute.xlu0 127
        %643 = vperm.xlu0 %642, %v622
        %v644 = vpop.permute.xlu0 %643
        %645 = vset.pattern.permute.xlu0 127
        %646 = vperm.xlu0 %645, %v623
        %v647 = vpop.permute.xlu0 %646
        %648 = vset.pattern.permute.xlu0 127
        %649 = vperm.xlu0 %648, %v624
        %v650 = vpop.permute.xlu0 %649
        %651 = vset.pattern.permute.xlu0 127
        %652 = vperm.xlu0 %651, %v625
        %v653 = vpop.permute.xlu0 %652
        %654 = vset.pattern.permute.xlu0 127
        %655 = vperm.xlu0 %654, %v626
        %v656 = vpop.permute.xlu0 %655
        %657 = vset.pattern.permute.xlu0 127
        %658 = vperm.xlu0 %657, %v627
        %v659 = vpop.permute.xlu0 %658
        %660 = vset.pattern.permute.xlu0 127
        %661 = vperm.xlu0 %660, %v628
        %v662 = vpop.permute.xlu0 %661
        %663 = vset.pattern.permute.xlu0 127
        %664 = vperm.xlu0 %663, %v629
        %v665 = vpop.permute.xlu0 %664
        %666 = vset.pattern.permute.xlu0 127
        %667 = vperm.xlu0 %666, %v630
        %v668 = vpop.permute.xlu0 %667
        %669 = vset.pattern.permute.xlu0 127
        %670 = vperm.xlu0 %669, %v631
        %v671 = vpop.permute.xlu0 %670
        %672 = vset.pattern.permute.xlu0 127
        %673 = vperm.xlu0 %672, %v632
        %v674 = vpop.permute.xlu0 %673
        %675 = vset.pattern.permute.xlu0 127
        %676 = vperm.xlu0 %675, %v633
        %v677 = vpop.permute.xlu0 %676
        %678 = vset.pattern.permute.xlu0 127
        %679 = vperm.xlu0 %678, %v634
        %v680 = vpop.permute.xlu0 %679
        %681 = vset.pattern.permute.xlu0 127
        %682 = vperm.xlu0 %681, %v635
        %v683 = vpop.permute.xlu0 %682
        %vm684 = vcmp.eq.s32.totalorder %v638, 1
        %vm685 = vcmp.eq.s32.totalorder %v641, 1
        %vm686 = vcmp.eq.s32.totalorder %v644, 1
        %vm687 = vcmp.eq.s32.totalorder %v647, 1
        %vm688 = vcmp.eq.s32.totalorder %v650, 1
        %vm689 = vcmp.eq.s32.totalorder %v653, 1
        %vm690 = vcmp.eq.s32.totalorder %v656, 1
        %vm691 = vcmp.eq.s32.totalorder %v659, 1
        %vm692 = vcmp.eq.s32.totalorder %v662, 1
        %vm693 = vcmp.eq.s32.totalorder %v665, 1
        %vm694 = vcmp.eq.s32.totalorder %v668, 1
        %vm695 = vcmp.eq.s32.totalorder %v671, 1
        %vm696 = vcmp.eq.s32.totalorder %v674, 1
        %vm697 = vcmp.eq.s32.totalorder %v677, 1
        %vm698 = vcmp.eq.s32.totalorder %v680, 1
        %vm699 = vcmp.eq.s32.totalorder %v683, 1
        %vm700 = vmand %vm619, %vm684
        %vm701 = vmand %vm619, %vm685
        %vm702 = vmand %vm619, %vm686
        %vm703 = vmand %vm619, %vm687
        %vm704 = vmand %vm619, %vm688
        %vm705 = vmand %vm619, %vm689
        %vm706 = vmand %vm619, %vm690
        %vm707 = vmand %vm619, %vm691
        %vm708 = vmand %vm619, %vm692
        %vm709 = vmand %vm619, %vm693
        %vm710 = vmand %vm619, %vm694
        %vm711 = vmand %vm619, %vm695
        %vm712 = vmand %vm619, %vm696
        %vm713 = vmand %vm619, %vm697
        %vm714 = vmand %vm619, %vm698
        %vm715 = vmand %vm619, %vm699
        %vm716 = vmor %vm586, %vm700
        %vm717 = vmor %vm587, %vm701
        %vm718 = vmor %vm588, %vm702
        %vm719 = vmor %vm589, %vm703
        %vm720 = vmor %vm590, %vm704
        %vm721 = vmor %vm591, %vm705
        %vm722 = vmor %vm592, %vm706
        %vm723 = vmor %vm593, %vm707
        %vm724 = vmor %vm594, %vm708
        %vm725 = vmor %vm595, %vm709
        %vm726 = vmor %vm596, %vm710
        %vm727 = vmor %vm597, %vm711
        %vm728 = vmor %vm598, %vm712
        %vm729 = vmor %vm599, %vm713
        %vm730 = vmor %vm600, %vm714
        %vm731 = vmor %vm601, %vm715
        %732 = vmax.xlane.f32.xlu0 %v284
        %v733 = vpop.xlane.xlu0 %732
        %734 = vmax.xlane.f32.xlu0 %v285
        %v735 = vpop.xlane.xlu0 %734
        %736 = vmax.xlane.f32.xlu0 %v286
        %v737 = vpop.xlane.xlu0 %736
        %738 = vmax.xlane.f32.xlu0 %v287
        %v739 = vpop.xlane.xlu0 %738
        %740 = vmax.xlane.f32.xlu0 %v288
        %v741 = vpop.xlane.xlu0 %740
        %742 = vmax.xlane.f32.xlu0 %v289
        %v743 = vpop.xlane.xlu0 %742
        %744 = vmax.xlane.f32.xlu0 %v290
        %v745 = vpop.xlane.xlu0 %744
        %746 = vmax.xlane.f32.xlu0 %v291
        %v747 = vpop.xlane.xlu0 %746
        %748 = vmax.xlane.f32.xlu0 %v292
        %v749 = vpop.xlane.xlu0 %748
        %750 = vmax.xlane.f32.xlu0 %v293
        %v751 = vpop.xlane.xlu0 %750
        %752 = vmax.xlane.f32.xlu0 %v294
        %v753 = vpop.xlane.xlu0 %752
        %754 = vmax.xlane.f32.xlu0 %v295
        %v755 = vpop.xlane.xlu0 %754
        %756 = vmax.xlane.f32.xlu0 %v296
        %v757 = vpop.xlane.xlu0 %756
        %758 = vmax.xlane.f32.xlu0 %v297
        %v759 = vpop.xlane.xlu0 %758
        %760 = vmax.xlane.f32.xlu0 %v298
        %v761 = vpop.xlane.xlu0 %760
        %762 = vmax.xlane.f32.xlu0 %v299
        %v763 = vpop.xlane.xlu0 %762
        %v764 = vsub.f32 %v284, %v733
        %v765 = vsub.f32 %v285, %v735
        %v766 = vsub.f32 %v286, %v737
        %v767 = vsub.f32 %v287, %v739
        %v768 = vsub.f32 %v288, %v741
        %v769 = vsub.f32 %v289, %v743
        %v770 = vsub.f32 %v290, %v745
        %v771 = vsub.f32 %v291, %v747
        %v772 = vsub.f32 %v292, %v749
        %v773 = vsub.f32 %v293, %v751
        %v774 = vsub.f32 %v294, %v753
        %v775 = vsub.f32 %v295, %v755
        %v776 = vsub.f32 %v296, %v757
        %v777 = vsub.f32 %v297, %v759
        %v778 = vsub.f32 %v298, %v761
        %v779 = vsub.f32 %v299, %v763
        %v780 = vmul.f32 %v764, 1.442695
        %v781 = vpow.pop %v780
        %v782 = vmul.f32 %v765, 1.442695
        %v783 = vpow.pop %v782
        %v784 = vmul.f32 %v766, 1.442695
        %v785 = vpow.pop %v784
        %v786 = vmul.f32 %v767, 1.442695
        %v787 = vpow.pop %v786
        %v788 = vmul.f32 %v768, 1.442695
        %v789 = vpow.pop %v788
        %v790 = vmul.f32 %v769, 1.442695
        %v791 = vpow.pop %v790
        %v792 = vmul.f32 %v770, 1.442695
        %v793 = vpow.pop %v792
        %v794 = vmul.f32 %v771, 1.442695
        %v795 = vpow.pop %v794
        %v796 = vmul.f32 %v772, 1.442695
        %v797 = vpow.pop %v796
        %v798 = vmul.f32 %v773, 1.442695
        %v799 = vpow.pop %v798
        %v800 = vmul.f32 %v774, 1.442695
        %v801 = vpow.pop %v800
        %v802 = vmul.f32 %v775, 1.442695
        %v803 = vpow.pop %v802
        %v804 = vmul.f32 %v776, 1.442695
        %v805 = vpow.pop %v804
        %v806 = vmul.f32 %v777, 1.442695
        %v807 = vpow.pop %v806
        %v808 = vmul.f32 %v778, 1.442695
        %v809 = vpow.pop %v808
        %v810 = vmul.f32 %v779, 1.442695
        %v811 = vpow.pop %v810
        %812 = vadd.xlane.f32.xlu0 %v781
        %v813 = vpop.xlane.xlu0 %812
        %814 = vadd.xlane.f32.xlu0 %v783
        %v815 = vpop.xlane.xlu0 %814
        %816 = vadd.xlane.f32.xlu0 %v785
        %v817 = vpop.xlane.xlu0 %816
        %818 = vadd.xlane.f32.xlu0 %v787
        %v819 = vpop.xlane.xlu0 %818
        %820 = vadd.xlane.f32.xlu0 %v789
        %v821 = vpop.xlane.xlu0 %820
        %822 = vadd.xlane.f32.xlu0 %v791
        %v823 = vpop.xlane.xlu0 %822
        %824 = vadd.xlane.f32.xlu0 %v793
        %v825 = vpop.xlane.xlu0 %824
        %826 = vadd.xlane.f32.xlu0 %v795
        %v827 = vpop.xlane.xlu0 %826
        %828 = vadd.xlane.f32.xlu0 %v797
        %v829 = vpop.xlane.xlu0 %828
        %830 = vadd.xlane.f32.xlu0 %v799
        %v831 = vpop.xlane.xlu0 %830
        %832 = vadd.xlane.f32.xlu0 %v801
        %v833 = vpop.xlane.xlu0 %832
        %834 = vadd.xlane.f32.xlu0 %v803
        %v835 = vpop.xlane.xlu0 %834
        %836 = vadd.xlane.f32.xlu0 %v805
        %v837 = vpop.xlane.xlu0 %836
        %838 = vadd.xlane.f32.xlu0 %v807
        %v839 = vpop.xlane.xlu0 %838
        %840 = vadd.xlane.f32.xlu0 %v809
        %v841 = vpop.xlane.xlu0 %840
        %842 = vadd.xlane.f32.xlu0 %v811
        %v843 = vpop.xlane.xlu0 %842
        %v845 = vlaneseq
        %v846 = vshrl.u32 %v845, 7
        %v847 = vsub.s32 0, %v846
        %v848 = vrot.slane %v246, %v847
        %v850 = vsub.f32 %v284, %v848
        %v851 = vsub.f32 %v285, %v848
        %v852 = vsub.f32 %v286, %v848
        %v853 = vsub.f32 %v287, %v848
        %v854 = vsub.f32 %v288, %v848
        %v855 = vsub.f32 %v289, %v848
        %v856 = vsub.f32 %v290, %v848
        %v857 = vsub.f32 %v291, %v848
        %v858 = vsub.f32 %v292, %v848
        %v859 = vsub.f32 %v293, %v848
        %v860 = vsub.f32 %v294, %v848
        %v861 = vsub.f32 %v295, %v848
        %v862 = vsub.f32 %v296, %v848
        %v863 = vsub.f32 %v297, %v848
        %v864 = vsub.f32 %v298, %v848
        %v865 = vsub.f32 %v299, %v848
        %v866 = vsel %vm716, %v850, 0.0
        %v867 = vsel %vm717, %v851, 0.0
        %v868 = vsel %vm718, %v852, 0.0
        %v869 = vsel %vm719, %v853, 0.0
        %v870 = vsel %vm720, %v854, 0.0
        %v871 = vsel %vm721, %v855, 0.0
        %v872 = vsel %vm722, %v856, 0.0
        %v873 = vsel %vm723, %v857, 0.0
        %v874 = vsel %vm724, %v858, 0.0
        %v875 = vsel %vm725, %v859, 0.0
        %v876 = vsel %vm726, %v860, 0.0
        %v877 = vsel %vm727, %v861, 0.0
        %v878 = vsel %vm728, %v862, 0.0
        %v879 = vsel %vm729, %v863, 0.0
        %v880 = vsel %vm730, %v864, 0.0
        %v881 = vsel %vm731, %v865, 0.0
        %882 = vadd.xlane.f32.xlu0 %v866
        %v883 = vpop.xlane.xlu0 %882
        %884 = vadd.xlane.f32.xlu0 %v867
        %v885 = vpop.xlane.xlu0 %884
        %886 = vadd.xlane.f32.xlu0 %v868
        %v887 = vpop.xlane.xlu0 %886
        %888 = vadd.xlane.f32.xlu0 %v869
        %v889 = vpop.xlane.xlu0 %888
        %890 = vadd.xlane.f32.xlu0 %v870
        %v891 = vpop.xlane.xlu0 %890
        %892 = vadd.xlane.f32.xlu0 %v871
        %v893 = vpop.xlane.xlu0 %892
        %894 = vadd.xlane.f32.xlu0 %v872
        %v895 = vpop.xlane.xlu0 %894
        %896 = vadd.xlane.f32.xlu0 %v873
        %v897 = vpop.xlane.xlu0 %896
        %898 = vadd.xlane.f32.xlu0 %v874
        %v899 = vpop.xlane.xlu0 %898
        %900 = vadd.xlane.f32.xlu0 %v875
        %v901 = vpop.xlane.xlu0 %900
        %902 = vadd.xlane.f32.xlu0 %v876
        %v903 = vpop.xlane.xlu0 %902
        %904 = vadd.xlane.f32.xlu0 %v877
        %v905 = vpop.xlane.xlu0 %904
        %906 = vadd.xlane.f32.xlu0 %v878
        %v907 = vpop.xlane.xlu0 %906
        %908 = vadd.xlane.f32.xlu0 %v879
        %v909 = vpop.xlane.xlu0 %908
        %910 = vadd.xlane.f32.xlu0 %v880
        %v911 = vpop.xlane.xlu0 %910
        %912 = vadd.xlane.f32.xlu0 %v881
        %v913 = vpop.xlane.xlu0 %912
        %v914 = vlog2.pop %v813
        %v915 = vmul.f32 %v914, 0.6931472
        %v916 = vlog2.pop %v815
        %v917 = vmul.f32 %v916, 0.6931472
        %v918 = vlog2.pop %v817
        %v919 = vmul.f32 %v918, 0.6931472
        %v920 = vlog2.pop %v819
        %v921 = vmul.f32 %v920, 0.6931472
        %v922 = vlog2.pop %v821
        %v923 = vmul.f32 %v922, 0.6931472
        %v924 = vlog2.pop %v823
        %v925 = vmul.f32 %v924, 0.6931472
        %v926 = vlog2.pop %v825
        %v927 = vmul.f32 %v926, 0.6931472
        %v928 = vlog2.pop %v827
        %v929 = vmul.f32 %v928, 0.6931472
        %v930 = vlog2.pop %v829
        %v931 = vmul.f32 %v930, 0.6931472
        %v932 = vlog2.pop %v831
        %v933 = vmul.f32 %v932, 0.6931472
        %v934 = vlog2.pop %v833
        %v935 = vmul.f32 %v934, 0.6931472
        %v936 = vlog2.pop %v835
        %v937 = vmul.f32 %v936, 0.6931472
        %v938 = vlog2.pop %v837
        %v939 = vmul.f32 %v938, 0.6931472
        %v940 = vlog2.pop %v839
        %v941 = vmul.f32 %v940, 0.6931472
        %v942 = vlog2.pop %v841
        %v943 = vmul.f32 %v942, 0.6931472
        %v944 = vlog2.pop %v843
        %v945 = vmul.f32 %v944, 0.6931472
        %v946 = vadd.f32 %v733, %v915
        %v947 = vadd.f32 %v735, %v917
        %v948 = vadd.f32 %v737, %v919
        %v949 = vadd.f32 %v739, %v921
        %v950 = vadd.f32 %v741, %v923
        %v951 = vadd.f32 %v743, %v925
        %v952 = vadd.f32 %v745, %v927
        %v953 = vadd.f32 %v747, %v929
        %v954 = vadd.f32 %v749, %v931
        %v955 = vadd.f32 %v751, %v933
        %v956 = vadd.f32 %v753, %v935
        %v957 = vadd.f32 %v755, %v937
        %v958 = vadd.f32 %v757, %v939
        %v959 = vadd.f32 %v759, %v941
        %v960 = vadd.f32 %v761, %v943
        %v961 = vadd.f32 %v763, %v945
        %v962 = vsub.f32 %v946, %v883
        %v963 = vsub.f32 %v947, %v885
        %v964 = vsub.f32 %v948, %v887
        %v965 = vsub.f32 %v949, %v889
        %v966 = vsub.f32 %v950, %v891
        %v967 = vsub.f32 %v951, %v893
        %v968 = vsub.f32 %v952, %v895
        %v969 = vsub.f32 %v953, %v897
        %v970 = vsub.f32 %v954, %v899
        %v971 = vsub.f32 %v955, %v901
        %v972 = vsub.f32 %v956, %v903
        %v973 = vsub.f32 %v957, %v905
        %v974 = vsub.f32 %v958, %v907
        %v975 = vsub.f32 %v959, %v909
        %v976 = vsub.f32 %v960, %v911
        %v977 = vsub.f32 %v961, %v913
        %v978 = vsel %vm316, 0.0, %v962
        %v979 = vsel %vm317, 0.0, %v963
        %v980 = vsel %vm318, 0.0, %v964
        %v981 = vsel %vm319, 0.0, %v965
        %v982 = vsel %vm320, 0.0, %v966
        %v983 = vsel %vm321, 0.0, %v967
        %v984 = vsel %vm322, 0.0, %v968
        %v985 = vsel %vm323, 0.0, %v969
        %v986 = vsel %vm324, 0.0, %v970
        %v987 = vsel %vm325, 0.0, %v971
        %v988 = vsel %vm326, 0.0, %v972
        %v989 = vsel %vm327, 0.0, %v973
        %v990 = vsel %vm328, 0.0, %v974
        %v991 = vsel %vm329, 0.0, %v975
        %v992 = vsel %vm330, 0.0, %v976
        %v993 = vsel %vm331, 0.0, %v977
        %995 = vset.pattern.permute.xlu0 0
        %996 = vperm.xlu0 %995, %v978
        %v997 = vpop.permute.xlu0 %996
        %1000 = vset.pattern.permute.xlu0 0
        %1001 = vperm.xlu0 %1000, %v979
        %v1002 = vpop.permute.xlu0 %1001
        %1005 = vset.pattern.permute.xlu0 0
        %1006 = vperm.xlu0 %1005, %v980
        %v1007 = vpop.permute.xlu0 %1006
        %1010 = vset.pattern.permute.xlu0 0
        %1011 = vperm.xlu0 %1010, %v981
        %v1012 = vpop.permute.xlu0 %1011
        %1015 = vset.pattern.permute.xlu0 0
        %1016 = vperm.xlu0 %1015, %v982
        %v1017 = vpop.permute.xlu0 %1016
        %1020 = vset.pattern.permute.xlu0 0
        %1021 = vperm.xlu0 %1020, %v983
        %v1022 = vpop.permute.xlu0 %1021
        %1025 = vset.pattern.permute.xlu0 0
        %1026 = vperm.xlu0 %1025, %v984
        %v1027 = vpop.permute.xlu0 %1026
        %1030 = vset.pattern.permute.xlu0 0
        %1031 = vperm.xlu0 %1030, %v985
        %v1032 = vpop.permute.xlu0 %1031
        %1035 = vset.pattern.permute.xlu0 0
        %1036 = vperm.xlu0 %1035, %v986
        %v1037 = vpop.permute.xlu0 %1036
        %1040 = vset.pattern.permute.xlu0 0
        %1041 = vperm.xlu0 %1040, %v987
        %v1042 = vpop.permute.xlu0 %1041
        %1045 = vset.pattern.permute.xlu0 0
        %1046 = vperm.xlu0 %1045, %v988
        %v1047 = vpop.permute.xlu0 %1046
        %1050 = vset.pattern.permute.xlu0 0
        %1051 = vperm.xlu0 %1050, %v989
        %v1052 = vpop.permute.xlu0 %1051
        %1055 = vset.pattern.permute.xlu0 0
        %1056 = vperm.xlu0 %1055, %v990
        %v1057 = vpop.permute.xlu0 %1056
        %1060 = vset.pattern.permute.xlu0 0
        %1061 = vperm.xlu0 %1060, %v991
        %v1062 = vpop.permute.xlu0 %1061
        %1065 = vset.pattern.permute.xlu0 0
        %1066 = vperm.xlu0 %1065, %v992
        %v1067 = vpop.permute.xlu0 %1066
        %1070 = vset.pattern.permute.xlu0 0
        %1071 = vperm.xlu0 %1070, %v993
        %v1072 = vpop.permute.xlu0 %1071
        %v1074 = vsel %vm266, %v997, 0.0
        %v1075 = vsel %vm267, %v1002, 0.0
        %v1076 = vsel %vm268, %v1007, 0.0
        %v1077 = vsel %vm269, %v1012, 0.0
        %v1078 = vsel %vm270, %v1017, 0.0
        %v1079 = vsel %vm271, %v1022, 0.0
        %v1080 = vsel %vm272, %v1027, 0.0
        %v1081 = vsel %vm273, %v1032, 0.0
        %v1082 = vsel %vm274, %v1037, 0.0
        %v1083 = vsel %vm275, %v1042, 0.0
        %v1084 = vsel %vm276, %v1047, 0.0
        %v1085 = vsel %vm277, %v1052, 0.0
        %v1086 = vsel %vm278, %v1057, 0.0
        %v1087 = vsel %vm279, %v1062, 0.0
        %v1088 = vsel %vm280, %v1067, 0.0
        %v1089 = vsel %vm281, %v1072, 0.0
        %v1090 = vadd.f32 %v1074, %v1075
        %v1091 = vadd.f32 %v1090, %v1076
        %v1092 = vadd.f32 %v1091, %v1077
        %v1093 = vadd.f32 %v1092, %v1078
        %v1094 = vadd.f32 %v1093, %v1079
        %v1095 = vadd.f32 %v1094, %v1080
        %v1096 = vadd.f32 %v1095, %v1081
        %v1097 = vadd.f32 %v1096, %v1082
        %v1098 = vadd.f32 %v1097, %v1083
        %v1099 = vadd.f32 %v1098, %v1084
        %v1100 = vadd.f32 %v1099, %v1085
        %v1101 = vadd.f32 %v1100, %v1086
        %v1102 = vadd.f32 %v1101, %v1087
        %v1103 = vadd.f32 %v1102, %v1088
        %v1104 = vadd.f32 %v1103, %v1089
        %v1105 = vrot.slane %v1104, 4
        %v1106 = vadd.f32 %v1104, %v1105
        %v1107 = vrot.slane %v1106, 2
        %v1108 = vadd.f32 %v1106, %v1107
        %v1109 = vrot.slane %v1108, 1
        %v1110 = vadd.f32 %v1108, %v1109
        %1111 = vst [vmem:[%s232] sm:$0x1] %v1110
        %s1112 = sand.u32 %s142, 1
        %s1113 = scalar_lea.sflag [#allocation3], %s1112
        %s1114 = sand.u32 %s142, 1
        %s1115 = scalar_lea.vmem [#allocation2], %s1114
        // Predicated region
        $region41: #{tpu_custom_call.1} parent=39 // pred_check
          %p1116 = pneg %p152
        $region42: #{tpu_custom_call.1} parent=39 // pred_check_branch
          %1118 = sbr.rel (%p1116) target = $region44
        $region43: #{tpu_custom_call.1} parent=39 // pred_region
          %s1120 = ssub.s32 16, 16
          %1121 = vsyncadd %s1113, %s1120
          %s1122 = smul.addr %s19, 16
          %s1123 = scalar_lea.hbm %s5, %s1122
          %s1125 = sshll.u32 %s1115, 4
          %s1126 = int_to_ptr.vmem [resolvable:$true] %s1125
          %1128 = dma.vmem_to_hbm [thread:$0]  %s1126, 16, %s1123, %s1113
        $region44: #{tpu_custom_call.1} parent=39 // pred_fallthru
          _
      $region40: #{tpu_custom_call.1} parent=5 // pred_fallthru
        _
      %p1129 = scmp.le.s32.totalorder 2, %s14
      // Predicated region
      $region45: #{tpu_custom_call.1} parent=5 // pred_check
        %p1130 = pneg %p1129
      $region46: #{tpu_custom_call.1} parent=5 // pred_check_branch
        %1132 = sbr.rel (%p1130) target = $region48
      $region47: #{tpu_custom_call.1} parent=5 // pred_region
        %s1133 = ssub.s32 %s14, 2
        // Predicated region
        $region49: #{tpu_custom_call.1} parent=47 // pred_check
          %p1134 = pneg %p158
        $region50: #{tpu_custom_call.1} parent=47 // pred_check_branch
          %1136 = sbr.rel (%p1134) target = $region52
        $region51: #{tpu_custom_call.1} parent=47 // pred_region
          %s1137 = sand.u32 %s143, 1
          %s1138 = scalar_lea.sflag [#allocation3], %s1137
          %s1139 = sand.u32 %s143, 1
          %s1140 = scalar_lea.vmem [#allocation2], %s1139
          %1141 = dma.done %s1138, 16
        $region52: #{tpu_custom_call.1} parent=47 // pred_fallthru
          _
      $region48: #{tpu_custom_call.1} parent=5 // pred_fallthru
        _
    $region6: #{tpu_custom_call.1} parent=1 // loop_footer
      %s18 = sadd.s32 1, %s14
    $region7: #{tpu_custom_call.1} parent=1 // loop_footer_branch
      %13 = sbr.rel target = $region3
    $region8: #{tpu_custom_call.1} parent=1 // loop_exit
      _
    %1142 = vsyncpa [#allocation3], 1
    %s1143 = scalar_lea.sflag [#allocation3], 1
    %1144 = vsyncpa %s1143, 1

</llo_original>
